<compile_context>
chip_gen: v7x
topology: tpu7x:2x2x1
jax: 0.10.0
libtpu: 0.0.40
codegen_flags: <defaults>
</compile_context>

<pallas_src>
import jax
import jax.numpy as jnp
from jax.experimental import pallas as pl
from jax.experimental.pallas import tpu as pltpu


def fusion_kernel(x_ref, w1_ref, b1_ref, w2_ref, b2_ref, out_ref):
    """One batch tile. x_ref: [TB, 2*in] = [audio | visual] along lanes."""
    # Layer 1, both branches in one MXU push -> [TB, 2*hid] (lane-dense vregs).
    hid = jnp.tanh(
        jnp.dot(x_ref[...], w1_ref[...], preferred_element_type=jnp.float32)
        + b1_ref[...]
    )
    # Layer 2, one MXU push -> [TB, 2*out] with h_a in lanes [0:out),
    # h_v in lanes [out:2*out).
    h2 = (jnp.dot(hid, w2_ref[...], preferred_element_type=jnp.float32)
          + b2_ref[...])

    out_dim = out_ref.shape[-1]
    h_a = h2[:, :out_dim]
    h_v = h2[:, out_dim:]

    # DMRN fusion: merged = (h_a + h_v)/2; out = (relu(h_a+m) + relu(h_v+m))/2
    merged = (h_a + h_v) * 0.5
    fused = (jnp.maximum(h_a + merged, 0.0)
             + jnp.maximum(h_v + merged, 0.0)) * 0.5
    out_ref[...] = fused.astype(out_ref.dtype)


def _round_up(x, m):
    return (x + m - 1) // m * m


def pack_params(p):
    """Host-side, once: block-diagonal weights + lane-concatenated biases."""
    input_size, hidden_size = p["w1a"].shape
    output_size = p["w2a"].shape[1]
    z1 = jnp.zeros((input_size, hidden_size), jnp.float32)
    z2 = jnp.zeros((hidden_size, output_size), jnp.float32)
    w1 = jnp.block([[p["w1a"], z1], [z1, p["w1v"]]])        # [2*in, 2*hid]
    w2 = jnp.block([[p["w2a"], z2], [z2, p["w2v"]]])        # [2*hid, 2*out]
    b1 = jnp.concatenate([p["b1a"], p["b1v"]], axis=1)       # [1, 2*hid]
    b2 = jnp.concatenate([p["b2a"], p["b2v"]], axis=1)       # [1, 2*out]
    return dict(w1=w1, b1=b1, w2=w2, b2=b2)


def fusion_net(h_audio, h_visual, packed, *, tile_b=512):
    batch, _ = h_audio.shape
    two_in, two_hid = packed["w1"].shape
    two_out = packed["w2"].shape[1]
    output_size = two_out // 2

    # Lane-concat the two modalities once in the wrapper (1 ref instead of 2).
    x = jnp.concatenate([h_audio, h_visual], axis=1).astype(jnp.float32)

    tb = min(tile_b, _round_up(batch, 8))
    padded = _round_up(batch, tb)
    if padded != batch:
        x = jnp.pad(x, ((0, padded - batch), (0, 0)))
    grid = (padded // tb,)

    flops = (2 * padded * two_in * two_hid
             + 2 * padded * two_hid * two_out
             + 8 * padded * output_size)
    bytes_accessed = 4 * (padded * two_in
                          + packed["w1"].size + packed["b1"].size
                          + packed["w2"].size + packed["b2"].size
                          + padded * output_size)

    out = pl.pallas_call(
        fusion_kernel,
        out_shape=jax.ShapeDtypeStruct((padded, output_size), jnp.float32),
        grid=grid,
        in_specs=[
            # activations: tiled over batch
            pl.BlockSpec((tb, two_in), lambda i: (i, 0)),
            # weights / biases: full blocks, VMEM-resident across all steps
            pl.BlockSpec((two_in, two_hid), lambda i: (0, 0)),
            pl.BlockSpec((1, two_hid), lambda i: (0, 0)),
            pl.BlockSpec((two_hid, two_out), lambda i: (0, 0)),
            pl.BlockSpec((1, two_out), lambda i: (0, 0)),
        ],
        out_specs=pl.BlockSpec((tb, output_size), lambda i: (i, 0)),
        compiler_params=pltpu.CompilerParams(
            dimension_semantics=("parallel",)),
        cost_estimate=pl.CostEstimate(
            flops=flops,
            transcendentals=padded * two_hid,
            bytes_accessed=bytes_accessed),
    )(x, packed["w1"], packed["b1"], packed["w2"], packed["b2"])

    if padded != batch:
        out = out[:batch]
    return out


def init_params(key, input_size, hidden_size, output_size):
    ks = jax.random.split(key, 8)

    def lin(kw, kb, fan_in, fan_out):
        bound = 1.0 / (fan_in ** 0.5)
        w = jax.random.uniform(kw, (fan_in, fan_out), jnp.float32, -bound, bound)
        b = jax.random.uniform(kb, (1, fan_out), jnp.float32, -bound, bound)
        return w, b

    w1a, b1a = lin(ks[0], ks[1], input_size, hidden_size)
    w2a, b2a = lin(ks[2], ks[3], hidden_size, output_size)
    w1v, b1v = lin(ks[4], ks[5], input_size, hidden_size)
    w2v, b2v = lin(ks[6], ks[7], hidden_size, output_size)
    return dict(w1a=w1a, b1a=b1a, w2a=w2a, b2a=b2a,
                w1v=w1v, b1v=b1v, w2v=w2v, b2v=b2v)


def fusion_net_ref(h_audio, h_visual, p):
    """Pure-JAX reference with the original per-branch weights."""
    h_a = jnp.tanh(h_audio @ p["w1a"] + p["b1a"]) @ p["w2a"] + p["b2a"]
    h_v = jnp.tanh(h_visual @ p["w1v"] + p["b1v"]) @ p["w2v"] + p["b2v"]
    merged = (h_a + h_v) * 0.5
    h_a2 = jax.nn.relu(h_a + merged)
    h_v2 = jax.nn.relu(h_v + merged)
    return (h_a2 + h_v2) * 0.5


if __name__ == "__main__":
    batch, input_size, hidden_size, output_size = 8, 32, 64, 32

    key = jax.random.PRNGKey(0)
    k_a, k_v, k_p = jax.random.split(key, 3)
    h_audio = jax.random.normal(k_a, (batch, input_size), jnp.float32)
    h_visual = jax.random.normal(k_v, (batch, input_size), jnp.float32)
    params = init_params(k_p, input_size, hidden_size, output_size)
    packed = pack_params(params)

    out = fusion_net(h_audio, h_visual, packed)
    out = jax.block_until_ready(out)

    ref = fusion_net_ref(h_audio, h_visual, params)
    assert out.shape == (batch, output_size)
    assert jnp.allclose(out, ref, atol=1e-5, rtol=1e-5)

    print("KERNEL_OK")
</pallas_src>

<mosaic_0001>
module attributes {stable_mosaic.version = 11 : i64} {
  func.func @fusion_kernel(%arg0: i32, %arg1: memref<8x64xf32, #tpu.memory_space<vmem>>, %arg2: memref<64x128xf32, #tpu.memory_space<vmem>>, %arg3: memref<1x128xf32, #tpu.memory_space<vmem>>, %arg4: memref<128x64xf32, #tpu.memory_space<vmem>>, %arg5: memref<1x64xf32, #tpu.memory_space<vmem>>, %arg6: memref<8x32xf32, #tpu.memory_space<vmem>>) attributes {dimension_semantics = [#tpu.dimension_semantics<parallel>], iteration_bounds = array<i64: 1>, scalar_prefetch = 0 : i64, scratch_operands = 0 : i64, tpu.core_type = #tpu.core_type<tc>, window_params = [{transform_indices = @transform_0, window_bounds = array<i64: 8, 64>}, {pipeline_mode = #tpu.pipeline_mode<synchronous>, transform_indices = @transform_1, window_bounds = array<i64: 64, 128>}, {pipeline_mode = #tpu.pipeline_mode<synchronous>, transform_indices = @transform_2, window_bounds = array<i64: 1, 128>}, {pipeline_mode = #tpu.pipeline_mode<synchronous>, transform_indices = @transform_3, window_bounds = array<i64: 128, 64>}, {pipeline_mode = #tpu.pipeline_mode<synchronous>, transform_indices = @transform_4, window_bounds = array<i64: 1, 64>}, {transform_indices = @transform_5, window_bounds = array<i64: 8, 32>}]} {
    %c0 = arith.constant 0 : index
    %c0_0 = arith.constant 0 : index
    %0 = vector.load %arg1[%c0, %c0_0] : memref<8x64xf32, #tpu.memory_space<vmem>>, vector<8x64xf32>
    %c0_1 = arith.constant 0 : index
    %c0_2 = arith.constant 0 : index
    %1 = vector.load %arg2[%c0_1, %c0_2] : memref<64x128xf32, #tpu.memory_space<vmem>>, vector<64x128xf32>
    %cst = arith.constant dense<0.000000e+00> : vector<8x128xf32>
    %2 = tpu.matmul %0, %1, %cst {dimension_numbers = #tpu.dot_dimension_numbers<[1], [0], [0], [1], [0, 0, 1, 1], [], []>} : vector<8x64xf32>, vector<64x128xf32>, vector<8x128xf32> -> vector<8x128xf32>
    %c0_3 = arith.constant 0 : index
    %c0_4 = arith.constant 0 : index
    %3 = vector.load %arg3[%c0_3, %c0_4] : memref<1x128xf32, #tpu.memory_space<vmem>>, vector<1x128xf32>
    %4 = vector.broadcast %3 : vector<1x128xf32> to vector<8x128xf32>
    %5 = arith.addf %2, %4 : vector<8x128xf32>
    %6 = math.tanh %5 : vector<8x128xf32>
    %c0_5 = arith.constant 0 : index
    %c0_6 = arith.constant 0 : index
    %7 = vector.load %arg4[%c0_5, %c0_6] : memref<128x64xf32, #tpu.memory_space<vmem>>, vector<128x64xf32>
    %cst_7 = arith.constant dense<0.000000e+00> : vector<8x64xf32>
    %8 = tpu.matmul %6, %7, %cst_7 {dimension_numbers = #tpu.dot_dimension_numbers<[1], [0], [0], [1], [0, 0, 1, 1], [], []>} : vector<8x128xf32>, vector<128x64xf32>, vector<8x64xf32> -> vector<8x64xf32>
    %c0_8 = arith.constant 0 : index
    %c0_9 = arith.constant 0 : index
    %9 = vector.load %arg5[%c0_8, %c0_9] : memref<1x64xf32, #tpu.memory_space<vmem>>, vector<1x64xf32>
    %10 = vector.broadcast %9 : vector<1x64xf32> to vector<8x64xf32>
    %11 = arith.addf %8, %10 : vector<8x64xf32>
    %12 = vector.extract_strided_slice %11 {offsets = [0, 0], sizes = [8, 32], strides = [1, 1]} : vector<8x64xf32> to vector<8x32xf32>
    %13 = vector.extract_strided_slice %11 {offsets = [0, 32], sizes = [8, 32], strides = [1, 1]} : vector<8x64xf32> to vector<8x32xf32>
    %14 = arith.addf %12, %13 : vector<8x32xf32>
    %cst_10 = arith.constant 5.000000e-01 : f32
    %15 = vector.broadcast %cst_10 : f32 to vector<8x32xf32>
    %16 = arith.mulf %14, %15 : vector<8x32xf32>
    %17 = arith.addf %12, %16 : vector<8x32xf32>
    %cst_11 = arith.constant 0.000000e+00 : f32
    %18 = vector.broadcast %cst_11 : f32 to vector<8x32xf32>
    %19 = arith.maximumf %17, %18 : vector<8x32xf32>
    %20 = arith.addf %13, %16 : vector<8x32xf32>
    %cst_12 = arith.constant 0.000000e+00 : f32
    %21 = vector.broadcast %cst_12 : f32 to vector<8x32xf32>
    %22 = arith.maximumf %20, %21 : vector<8x32xf32>
    %23 = arith.addf %19, %22 : vector<8x32xf32>
    %cst_13 = arith.constant 5.000000e-01 : f32
    %24 = vector.broadcast %cst_13 : f32 to vector<8x32xf32>
    %25 = arith.mulf %23, %24 : vector<8x32xf32>
    %c0_14 = arith.constant 0 : index
    %c0_15 = arith.constant 0 : index
    %26 = vector.load %arg6[%c0_14, %c0_15] : memref<8x32xf32, #tpu.memory_space<vmem>>, vector<8x32xf32>
    tpu.vector_store %arg6[%c0_14, %c0_15], %25 {strides = array<i32>} : memref<8x32xf32, #tpu.memory_space<vmem>>, vector<8x32xf32>,
    return
  }
  func.func @transform_0(%arg0: i32) -> (i32, i32) {
    %c0_i32 = arith.constant 0 : i32
    %c0_i32_0 = arith.constant 0 : i32
    return %arg0, %c0_i32 : i32, i32
  }
  func.func @transform_1(%arg0: i32) -> (i32, i32) {
    %c0_i32 = arith.constant 0 : i32
    %c0_i32_0 = arith.constant 0 : i32
    %c0_i32_1 = arith.constant 0 : i32
    return %c0_i32, %c0_i32_0 : i32, i32
  }
  func.func @transform_2(%arg0: i32) -> (i32, i32) {
    %c0_i32 = arith.constant 0 : i32
    %c0_i32_0 = arith.constant 0 : i32
    %c0_i32_1 = arith.constant 0 : i32
    return %c0_i32, %c0_i32_0 : i32, i32
  }
  func.func @transform_3(%arg0: i32) -> (i32, i32) {
    %c0_i32 = arith.constant 0 : i32
    %c0_i32_0 = arith.constant 0 : i32
    %c0_i32_1 = arith.constant 0 : i32
    return %c0_i32, %c0_i32_0 : i32, i32
  }
  func.func @transform_4(%arg0: i32) -> (i32, i32) {
    %c0_i32 = arith.constant 0 : i32
    %c0_i32_0 = arith.constant 0 : i32
    %c0_i32_1 = arith.constant 0 : i32
    return %c0_i32, %c0_i32_0 : i32, i32
  }
  func.func @transform_5(%arg0: i32) -> (i32, i32) {
    %c0_i32 = arith.constant 0 : i32
    %c0_i32_0 = arith.constant 0 : i32
    return %arg0, %c0_i32 : i32, i32
  }
}

</mosaic_0001>

<llo_original>
// kernel: tpu_custom_call.1
$region0: #{tpu_custom_call.1}
  #allocation0 [shape = 'u32[]', space=smem, size = 0x4, offset = 0x4, fixed_abs, tag = 'smem constant byte address 0x4 - core index']
  #allocation1 [shape = 'u32[144,128]{1,0:T(1,128)}', space=vmem, size = 0x12000, scoped, tag = 'internal scratch']
  %s0 = inlined_call_operand.vmem [shape: f32[8,64], index: 0, kind: input, shape index: {}]
  %s1 = inlined_call_operand.vmem [shape: f32[64,128], index: 1, kind: input, shape index: {}]
  %s2 = inlined_call_operand.vmem [shape: f32[1,128], index: 2, kind: input, shape index: {}]
  %s3 = inlined_call_operand.vmem [shape: f32[128,64], index: 3, kind: input, shape index: {}]
  %s4 = inlined_call_operand.vmem [shape: f32[1,64], index: 4, kind: input, shape index: {}]
  %s5 = inlined_call_operand.hbm [shape: f32[8,32], index: 5, kind: output, shape index: {}]
  %s6 = sld [smem:[#allocation0]]
  $region30: #{tpu_custom_call.1} parent=0
    _
  %s8 = ssub.s32 1, %s6
  %s9 = scalar_select 0, %s8, %s6
  $region1: #{tpu_custom_call.1} parent=0
    #allocation2 [shape = 'u8[4096]{0}', space=vmem, size = 0x1000, scoped, tag = 'output window, operand 0, single buffered']
    #allocation3 [shape = 's32[1]{0}', space=sflag, size = 0x4, scoped, tag = 'scoped memory for tpu_custom_call.1']
    %10 = vsyncpa [#allocation3], 0
    // Predicated region
    $region2: #{tpu_custom_call.1} parent=1 // pred_check
      _
    $region3: #{tpu_custom_call.1} parent=1 // pred_check_branch
      %12 = sbr.rel (0) target = $region5
    $region4: #{tpu_custom_call.1} parent=1 // pred_region
      _
    $region5: #{tpu_custom_call.1} parent=1 // pred_fallthru
      _
    // Predicated region
    $region6: #{tpu_custom_call.1} parent=1 // pred_check
      _
    $region7: #{tpu_custom_call.1} parent=1 // pred_check_branch
      %14 = sbr.rel (0) target = $region9
    $region8: #{tpu_custom_call.1} parent=1 // pred_region
      _
    $region9: #{tpu_custom_call.1} parent=1 // pred_fallthru
      _
    // Predicated region
    $region10: #{tpu_custom_call.1} parent=1 // pred_check
      _
    $region11: #{tpu_custom_call.1} parent=1 // pred_check_branch
      %16 = sbr.rel (0) target = $region13
    $region12: #{tpu_custom_call.1} parent=1 // pred_region
      _
    $region13: #{tpu_custom_call.1} parent=1 // pred_fallthru
      _
    // Predicated region
    $region14: #{tpu_custom_call.1} parent=1 // pred_check
      _
    $region15: #{tpu_custom_call.1} parent=1 // pred_check_branch
      %18 = sbr.rel (0) target = $region17
    $region16: #{tpu_custom_call.1} parent=1 // pred_region
      _
    $region17: #{tpu_custom_call.1} parent=1 // pred_fallthru
      _
    // Predicated region
    $region18: #{tpu_custom_call.1} parent=1 // pred_check
      _
    $region19: #{tpu_custom_call.1} parent=1 // pred_check_branch
      %20 = sbr.rel (0) target = $region21
    $region20: #{tpu_custom_call.1} parent=1 // pred_region
      _
    $region21: #{tpu_custom_call.1} parent=1 // pred_fallthru
      _
    %v21 = vld [vmem:[%s0] sm:$0xff]
    %v22 = vld [vmem:[%s1] sm:$0xff]
    %v23 = vld [vmem:[%s1 + $0x8] sm:$0xff]
    %v24 = vld [vmem:[%s1 + $0x10] sm:$0xff]
    %v25 = vld [vmem:[%s1 + $0x18] sm:$0xff]
    %v26 = vld [vmem:[%s1 + $0x20] sm:$0xff]
    %v27 = vld [vmem:[%s1 + $0x28] sm:$0xff]
    %v28 = vld [vmem:[%s1 + $0x30] sm:$0xff]
    %v29 = vld [vmem:[%s1 + $0x38] sm:$0xff]
    %v30 = vld [vmem:[%s2] sm:$0x1]
    %v32 = vlaneseq
    %v33 = vshrl.u32 %v32, 7
    %v34 = vsub.s32 0, %v33
    %v35 = vrot.slane %v30, %v34
    %vm37 = vcmask 523264
    %v39 = vsel %vm37, %v21, 0
    %41 = vmatprep.subr.mxu0 0.0
    %42 = vmatpush1.msra.mxu0 %v22
    %43 = vmatprep.subr.mxu0 0.0
    %44 = vmatpush1.msra.mxu0 %v23
    %45 = vmatprep.subr.mxu0 0.0
    %46 = vmatpush1.msra.mxu0 %v24
    %47 = vmatprep.subr.mxu0 0.0
    %48 = vmatpush1.msra.mxu0 %v25
    %49 = vmatprep.subr.mxu0 0.0
    %50 = vmatpush1.msra.mxu0 %v26
    %51 = vmatprep.subr.mxu0 0.0
    %52 = vmatpush1.msra.mxu0 %v27
    %53 = vmatprep.subr.mxu0 0.0
    %54 = vmatpush1.msra.mxu0 %v28
    %55 = vmatprep.subr.mxu0 0.0
    %56 = vmatpush1.msra.mxu0 %v29
    %57 = vmatprep.subr.mxu0 0.0
    %58 = vmatpush1.msra.mxu0 0.0
    %59 = vmatprep.subr.mxu0 0.0
    %60 = vmatpush1.msra.mxu0 0.0
    %61 = vmatprep.subr.mxu0 0.0
    %62 = vmatpush1.msra.mxu0 0.0
    %63 = vmatprep.subr.mxu0 0.0
    %64 = vmatpush1.msra.mxu0 0.0
    %65 = vmatprep.subr.mxu0 0.0
    %66 = vmatpush1.msra.mxu0 0.0
    %67 = vmatprep.subr.mxu0 0.0
    %68 = vmatpush1.msra.mxu0 0.0
    %69 = vmatprep.subr.mxu0 0.0
    %70 = vmatpush1.msra.mxu0 0.0
    %71 = vmatprep.subr.mxu0 0.0
    %72 = vmatpush1.msra.mxu0 0.0
    %73 = vmatprep.subr.mxu0 0.0
    %74 = vmatpush1.msra.mxu0 0.0
    %75 = vmatprep.subr.mxu0 0.0
    %76 = vmatpush1.msra.mxu0 0.0
    %77 = vmatprep.subr.mxu0 0.0
    %78 = vmatpush1.msra.mxu0 0.0
    %79 = vmatprep.subr.mxu0 0.0
    %80 = vmatpush1.msra.mxu0 0.0
    %81 = vmatprep.subr.mxu0 0.0
    %82 = vmatpush1.msra.mxu0 0.0
    %83 = vmatprep.subr.mxu0 0.0
    %84 = vmatpush1.msra.mxu0 0.0
    %85 = vmatprep.subr.mxu0 0.0
    %86 = vmatpush1.msra.mxu0 0.0
    %87 = vmatprep.subr.mxu0 0.0
    %88 = vmatpush1.msra.mxu0 0.0
    %89 = vmatprep.subr.mxu0 0.0
    %90 = vmatpush1.msra.mxu0 0.0
    %91 = vmatprep.subr.mxu0 0.0
    %92 = vmatpush1.msra.mxu0 0.0
    %93 = vmatprep.subr.mxu0 0.0
    %94 = vmatpush1.msra.mxu0 0.0
    %95 = vmatprep.subr.mxu0 0.0
    %96 = vmatpush1.msra.mxu0 0.0
    %97 = vmatprep.subr.mxu0 0.0
    %98 = vmatpush1.msra.mxu0 0.0
    %99 = vmatprep.subr.mxu0 0.0
    %100 = vmatpush1.msra.mxu0 0.0
    %101 = vmatprep.subr.mxu0 0.0
    %102 = vmatpush1.msra.mxu0 0.0
    %103 = vmatprep.subr.mxu0 0.0
    %104 = vmatpush1.msra.mxu0 0.0
    %105 = vmatprep.mubr.f32.mxu0 0.0
    %106 = vmatmul.mubr.f32.gmra.mrb[0].mxu0 %v39
    %v107 = vpop.f32.mrb[0].mxu0
    %v108 = vadd.f32 %v35, %v107
    %v109 = vpop.f32.mrb[0].mxu0
    %110 = vdwg.mxu0
    %v111 = vtanh.pop %v108
    %v112 = vld [vmem:[%s3] sm:$0xff]
    %v113 = vld [vmem:[%s3 + $0x8] sm:$0xff]
    %v114 = vld [vmem:[%s3 + $0x10] sm:$0xff]
    %v115 = vld [vmem:[%s3 + $0x18] sm:$0xff]
    %v116 = vld [vmem:[%s3 + $0x20] sm:$0xff]
    %v117 = vld [vmem:[%s3 + $0x28] sm:$0xff]
    %v118 = vld [vmem:[%s3 + $0x30] sm:$0xff]
    %v119 = vld [vmem:[%s3 + $0x38] sm:$0xff]
    %v120 = vld [vmem:[%s3 + $0x40] sm:$0xff]
    %v121 = vld [vmem:[%s3 + $0x48] sm:$0xff]
    %v122 = vld [vmem:[%s3 + $0x50] sm:$0xff]
    %v123 = vld [vmem:[%s3 + $0x58] sm:$0xff]
    %v124 = vld [vmem:[%s3 + $0x60] sm:$0xff]
    %v125 = vld [vmem:[%s3 + $0x68] sm:$0xff]
    %v126 = vld [vmem:[%s3 + $0x70] sm:$0xff]
    %v127 = vld [vmem:[%s3 + $0x78] sm:$0xff]
    %v128 = vld [vmem:[%s4] sm:$0x1]
    %v130 = vlaneseq
    %v131 = vshrl.u32 %v130, 7
    %v132 = vsub.s32 0, %v131
    %v133 = vrot.slane %v128, %v132
    %135 = vmatprep.subr.mxu0 0.0
    %136 = vmatpush1.msra.mxu0 %v112
    %137 = vmatprep.subr.mxu0 0.0
    %138 = vmatpush1.msra.mxu0 %v113
    %139 = vmatprep.subr.mxu0 0.0
    %140 = vmatpush1.msra.mxu0 %v114
    %141 = vmatprep.subr.mxu0 0.0
    %142 = vmatpush1.msra.mxu0 %v115
    %143 = vmatprep.subr.mxu0 0.0
    %144 = vmatpush1.msra.mxu0 %v116
    %145 = vmatprep.subr.mxu0 0.0
    %146 = vmatpush1.msra.mxu0 %v117
    %147 = vmatprep.subr.mxu0 0.0
    %148 = vmatpush1.msra.mxu0 %v118
    %149 = vmatprep.subr.mxu0 0.0
    %150 = vmatpush1.msra.mxu0 %v119
    %151 = vmatprep.subr.mxu0 0.0
    %152 = vmatpush1.msra.mxu0 %v120
    %153 = vmatprep.subr.mxu0 0.0
    %154 = vmatpush1.msra.mxu0 %v121
    %155 = vmatprep.subr.mxu0 0.0
    %156 = vmatpush1.msra.mxu0 %v122
    %157 = vmatprep.subr.mxu0 0.0
    %158 = vmatpush1.msra.mxu0 %v123
    %159 = vmatprep.subr.mxu0 0.0
    %160 = vmatpush1.msra.mxu0 %v124
    %161 = vmatprep.subr.mxu0 0.0
    %162 = vmatpush1.msra.mxu0 %v125
    %163 = vmatprep.subr.mxu0 0.0
    %164 = vmatpush1.msra.mxu0 %v126
    %165 = vmatprep.subr.mxu0 0.0
    %166 = vmatpush1.msra.mxu0 %v127
    %167 = vmatprep.subr.mxu0 0.0
    %168 = vmatpush1.msra.mxu0 0.0
    %169 = vmatprep.subr.mxu0 0.0
    %170 = vmatpush1.msra.mxu0 0.0
    %171 = vmatprep.subr.mxu0 0.0
    %172 = vmatpush1.msra.mxu0 0.0
    %173 = vmatprep.subr.mxu0 0.0
    %174 = vmatpush1.msra.mxu0 0.0
    %175 = vmatprep.subr.mxu0 0.0
    %176 = vmatpush1.msra.mxu0 0.0
    %177 = vmatprep.subr.mxu0 0.0
    %178 = vmatpush1.msra.mxu0 0.0
    %179 = vmatprep.subr.mxu0 0.0
    %180 = vmatpush1.msra.mxu0 0.0
    %181 = vmatprep.subr.mxu0 0.0
    %182 = vmatpush1.msra.mxu0 0.0
    %183 = vmatprep.subr.mxu0 0.0
    %184 = vmatpush1.msra.mxu0 0.0
    %185 = vmatprep.subr.mxu0 0.0
    %186 = vmatpush1.msra.mxu0 0.0
    %187 = vmatprep.subr.mxu0 0.0
    %188 = vmatpush1.msra.mxu0 0.0
    %189 = vmatprep.subr.mxu0 0.0
    %190 = vmatpush1.msra.mxu0 0.0
    %191 = vmatprep.subr.mxu0 0.0
    %192 = vmatpush1.msra.mxu0 0.0
    %193 = vmatprep.subr.mxu0 0.0
    %194 = vmatpush1.msra.mxu0 0.0
    %195 = vmatprep.subr.mxu0 0.0
    %196 = vmatpush1.msra.mxu0 0.0
    %197 = vmatprep.subr.mxu0 0.0
    %198 = vmatpush1.msra.mxu0 0.0
    %199 = vmatprep.mubr.f32.mxu0 0.0
    %200 = vmatmul.mubr.f32.gmra.mrb[0].mxu0 %v111
    %v201 = vpop.f32.mrb[0].mxu0
    %v202 = vadd.f32 %v133, %v201
    %v203 = vpop.f32.mrb[0].mxu0
    %204 = vdwg.mxu0
    %206 = vrot.lane.b32.xlu0 %v202, 96
    %v207 = vpop.permute.xlu0 %206
    %v209 = vadd.f32 %v202, %v207
    %v210 = vmul.f32 %v209, 0.5
    %v211 = vadd.f32 %v202, %v210
    %v212 = vmax.f32 %v211, 0.0
    %214 = vrot.lane.b32.xlu0 %v210, 32
    %v215 = vpop.permute.xlu0 %214
    %v217 = vadd.f32 %v202, %v215
    %v218 = vmax.f32 %v217, 0.0
    %220 = vrot.lane.b32.xlu0 %v218, 96
    %v221 = vpop.permute.xlu0 %220
    %v223 = vadd.f32 %v212, %v221
    %v224 = vmul.f32 %v223, 0.5
    %vm225 = vcmask 261120
    %226 = vst.msk [vmem:[#allocation2] sm:$0xff] %vm225, %v224
    // Predicated region
    $region22: #{tpu_custom_call.1} parent=1 // pred_check
      _
    $region23: #{tpu_custom_call.1} parent=1 // pred_check_branch
      %228 = sbr.rel (0) target = $region25
    $region24: #{tpu_custom_call.1} parent=1 // pred_region
      %s230 = ssub.s32 128, 128
      %231 = vsyncadd [#allocation3], %s230
      %s233 = sshll.u32 [#allocation2], 4
      %s234 = int_to_ptr.vmem [resolvable:$true] %s233
      %236 = dma.vmem_to_hbm [thread:$0]  %s234, 128, %s5, [#allocation3]
    $region25: #{tpu_custom_call.1} parent=1 // pred_fallthru
      _
    // Predicated region
    $region26: #{tpu_custom_call.1} parent=1 // pred_check
      _
    $region27: #{tpu_custom_call.1} parent=1 // pred_check_branch
      %238 = sbr.rel (0) target = $region29
    $region28: #{tpu_custom_call.1} parent=1 // pred_region
      %239 = dma.done [#allocation3], 128
    $region29: #{tpu_custom_call.1} parent=1 // pred_fallthru
      _
    %240 = vsyncpa [#allocation3], 1

</llo_original>
